<compile_context>
chip_gen: v6e
topology: v6e:2x2x1
jax: 0.10.0
libtpu: 0.0.40
codegen_flags: <defaults>
</compile_context>

<pallas_src>
import functools

import jax
import jax.numpy as jnp
from jax.experimental import pallas as pl
from jax.experimental.pallas import tpu as pltpu


def _baseline_nn_kernel(seq_len,
                        tokens_smem,   # (B*S,) int32 in SMEM (scalar prefetch)
                        wfused_ref,    # (V, H)  f32 : emb_weights @ w1 (fused)
                        b1_ref,        # (1, H)  f32
                        gamma_ref,     # (1, H)  f32
                        beta_ref,      # (1, H)  f32
                        w2_ref,        # (H, CP) f32 (class dim padded to lanes)
                        b2_ref,        # (1, CP) f32 (padding columns = -1e30)
                        out_ref,       # (B, CP) f32
                        h_ref):        # (B, H)  f32 VMEM scratch
    batch = h_ref.shape[0]

    # --- embedding-bag sum + linear1, as an in-kernel row gather over W_fused ---
    @pl.loop(0, batch)
    def _(b):
        base = b * seq_len
        acc = wfused_ref[pl.ds(tokens_smem[base], 1), :]            # (1, H)
        for s in range(1, seq_len):                                 # static unroll
            acc = acc + wfused_ref[pl.ds(tokens_smem[base + s], 1), :]
        h_ref[pl.ds(b, 1), :] = acc

    h = h_ref[...] + b1_ref[...]                                    # (B, H)

    # --- BatchNorm1d (training-mode batch stats), affine folded to scale/shift ---
    mean = jnp.mean(h, axis=0, keepdims=True)                       # (1, H)
    mean_sq = jnp.mean(h * h, axis=0, keepdims=True)
    var = mean_sq - mean * mean                                     # biased var
    scale = gamma_ref[...] * jax.lax.rsqrt(var + 1e-5)              # (1, H)
    shift = beta_ref[...] - mean * scale
    h = h * scale + shift

    # --- ReLU (dropout p=0.0 -> identity) ---
    h = jnp.maximum(h, 0.0)

    # --- linear2, lane-dense (class dim padded to CP = multiple of 128) ---
    logits = jnp.dot(h, w2_ref[...],
                     preferred_element_type=jnp.float32) + b2_ref[...]

    # --- softmax over classes; padded columns hold -1e30 -> exp underflows to 0 ---
    m = jnp.max(logits, axis=1, keepdims=True)
    e = jnp.exp(logits - m)
    denom = jnp.sum(e, axis=1, keepdims=True)
    out_ref[...] = e * pl.reciprocal(denom, approx=True)


def baseline_nn_forward(tokens, emb_weights, w1, b1, gamma, beta, w2, b2):
    """tokens: (B, S) int32 token ids; emb_weights: (V, E) frozen embedding table."""
    B, S = tokens.shape
    V, E = emb_weights.shape
    H = w1.shape[1]
    C = w2.shape[1]
    CP = max(128, -(-C // 128) * 128)          # lane-dense padded class width

    # Fold the frozen embedding and linear1 into a single (V, H) gather table.
    # Exact algebraic equivalence: (sum_s emb[t_s]) @ w1 == sum_s (emb @ w1)[t_s].
    w_fused = jnp.dot(emb_weights, w1, preferred_element_type=jnp.float32)

    # Pad the class dim to CP lanes; -1e30 bias on padding keeps softmax exact.
    w2p = jnp.concatenate([w2, jnp.zeros((H, CP - C), w2.dtype)], axis=1)
    b2p = jnp.concatenate([b2, jnp.full((1, CP - C), -1e30, b2.dtype)], axis=1)

    tokens_flat = tokens.reshape(-1).astype(jnp.int32)   # 1D -> compact SMEM

    grid_spec = pltpu.PrefetchScalarGridSpec(
        num_scalar_prefetch=1,
        grid=(1,),
        in_specs=[
            pl.BlockSpec((V, H), lambda i, tok: (0, 0)),
            pl.BlockSpec((1, H), lambda i, tok: (0, 0)),
            pl.BlockSpec((1, H), lambda i, tok: (0, 0)),
            pl.BlockSpec((1, H), lambda i, tok: (0, 0)),
            pl.BlockSpec((H, CP), lambda i, tok: (0, 0)),
            pl.BlockSpec((1, CP), lambda i, tok: (0, 0)),
        ],
        out_specs=pl.BlockSpec((B, CP), lambda i, tok: (0, 0)),
        scratch_shapes=[pltpu.VMEM((B, H), jnp.float32)],
    )

    out_padded = pl.pallas_call(
        functools.partial(_baseline_nn_kernel, S),
        out_shape=jax.ShapeDtypeStruct((B, CP), jnp.float32),
        grid_spec=grid_spec,
        compiler_params=pltpu.CompilerParams(
            dimension_semantics=("arbitrary",)),
    )(tokens_flat, w_fused, b1, gamma, beta, w2p, b2p)

    return out_padded[:, :C]


def _reference(tokens, emb_weights, w1, b1, gamma, beta, w2, b2):
    """Pure-JAX reference with the original (unfused) op order."""
    embedded = emb_weights[tokens].sum(axis=1)                 # (B, E)
    h = embedded @ w1 + b1
    mean = h.mean(axis=0, keepdims=True)
    var = ((h - mean) ** 2).mean(axis=0, keepdims=True)
    h = (h - mean) / jnp.sqrt(var + 1e-5) * gamma + beta
    h = jnp.maximum(h, 0.0)
    logits = h @ w2 + b2
    return jax.nn.softmax(logits, axis=1)


if __name__ == "__main__":
    # Small shapes consistent with the module: tokens (B,S) -> (B,E) -> (B,H) -> (B,C)
    B, S = 128, 16        # batch (spec batch_size=128), sequence length
    V, E = 1024, 128      # vocab size, embedding dim (FTEMB columns)
    H = 256               # hidden_dim (small, lane-aligned stand-in for 512)
    C = 16                # num_classes

    key = jax.random.PRNGKey(0)
    k_tok, k_emb, k_w1, k_b1, k_w2, k_b2 = jax.random.split(key, 6)

    tokens = jax.random.randint(k_tok, (B, S), 0, V, dtype=jnp.int32)
    emb_weights = jax.random.normal(k_emb, (V, E), dtype=jnp.float32) * 0.1
    # linear1: torch stores weight (H, E); we keep the transposed (E, H) layout.
    w1 = jax.random.normal(k_w1, (E, H), dtype=jnp.float32) * (1.0 / E ** 0.5)
    b1 = jax.random.normal(k_b1, (1, H), dtype=jnp.float32) * 0.01
    gamma = jnp.ones((1, H), dtype=jnp.float32)       # BN weight init = 1
    beta = jnp.zeros((1, H), dtype=jnp.float32)       # BN bias init = 0
    w2 = jax.random.normal(k_w2, (H, C), dtype=jnp.float32) * (1.0 / H ** 0.5)
    b2 = jax.random.normal(k_b2, (1, C), dtype=jnp.float32) * 0.01

    probs = baseline_nn_forward(tokens, emb_weights, w1, b1, gamma, beta, w2, b2)
    probs = jax.block_until_ready(probs)

    ref = _reference(tokens, emb_weights, w1, b1, gamma, beta, w2, b2)

    assert probs.shape == (B, C)
    row_sums = jnp.sum(probs, axis=1)
    assert bool(jnp.all(jnp.abs(row_sums - 1.0) < 5e-3))
    assert bool(jnp.max(jnp.abs(probs - ref)) < 5e-3)
    print("KERNEL_OK")
</pallas_src>

<mosaic_0001>
module attributes {stable_mosaic.version = 11 : i64} {
  func.func @_baseline_nn_kernel(%arg0: i32, %arg1: memref<2048xi32, #tpu.memory_space<smem>>, %arg2: memref<1024x256xf32, #tpu.memory_space<vmem>>, %arg3: memref<1x256xf32, #tpu.memory_space<vmem>>, %arg4: memref<1x256xf32, #tpu.memory_space<vmem>>, %arg5: memref<1x256xf32, #tpu.memory_space<vmem>>, %arg6: memref<256x128xf32, #tpu.memory_space<vmem>>, %arg7: memref<1x128xf32, #tpu.memory_space<vmem>>, %arg8: memref<128x128xf32, #tpu.memory_space<vmem>>, %arg9: memref<128x256xf32, #tpu.memory_space<vmem>>) attributes {dimension_semantics = [#tpu.dimension_semantics<arbitrary>], iteration_bounds = array<i64: 1>, scalar_prefetch = 1 : i64, scratch_operands = 1 : i64, tpu.core_type = #tpu.core_type<tc>, window_params = [{pipeline_mode = #tpu.pipeline_mode<synchronous>, transform_indices = @transform_0, window_bounds = array<i64: 1024, 256>}, {pipeline_mode = #tpu.pipeline_mode<synchronous>, transform_indices = @transform_1, window_bounds = array<i64: 1, 256>}, {pipeline_mode = #tpu.pipeline_mode<synchronous>, transform_indices = @transform_2, window_bounds = array<i64: 1, 256>}, {pipeline_mode = #tpu.pipeline_mode<synchronous>, transform_indices = @transform_3, window_bounds = array<i64: 1, 256>}, {pipeline_mode = #tpu.pipeline_mode<synchronous>, transform_indices = @transform_4, window_bounds = array<i64: 256, 128>}, {pipeline_mode = #tpu.pipeline_mode<synchronous>, transform_indices = @transform_5, window_bounds = array<i64: 1, 128>}, {pipeline_mode = #tpu.pipeline_mode<synchronous>, transform_indices = @transform_6, window_bounds = array<i64: 128, 128>}]} {
    %c0_i32 = arith.constant 0 : i32
    %c128_i32 = arith.constant 128 : i32
    %0 = arith.addi %c0_i32, %c128_i32 : i32
    %c1_i32 = arith.constant 1 : i32
    scf.for %arg10 = %c0_i32 to %0 step %c1_i32  : i32 {
      %c1_i32_22 = arith.constant 1 : i32
      %46 = arith.muli %arg10, %c1_i32_22 : i32
      %c0_i32_23 = arith.constant 0 : i32
      %47 = arith.addi %c0_i32_23, %46 : i32
      %c16_i32 = arith.constant 16 : i32
      %48 = arith.muli %47, %c16_i32 : i32
      %49 = arith.index_cast %48 : i32 to index
      %50 = memref.load %arg1[%49] : memref<2048xi32, #tpu.memory_space<smem>>
      %51 = arith.index_cast %50 : i32 to index
      %c0_24 = arith.constant 0 : index
      %52 = vector.load %arg2[%51, %c0_24] : memref<1024x256xf32, #tpu.memory_space<vmem>>, vector<1x256xf32>
      %c1_i32_25 = arith.constant 1 : i32
      %53 = arith.addi %48, %c1_i32_25 : i32
      %54 = arith.index_cast %53 : i32 to index
      %55 = memref.load %arg1[%54] : memref<2048xi32, #tpu.memory_space<smem>>
      %56 = arith.index_cast %55 : i32 to index
      %c0_26 = arith.constant 0 : index
      %57 = vector.load %arg2[%56, %c0_26] : memref<1024x256xf32, #tpu.memory_space<vmem>>, vector<1x256xf32>
      %58 = arith.addf %52, %57 : vector<1x256xf32>
      %c2_i32 = arith.constant 2 : i32
      %59 = arith.addi %48, %c2_i32 : i32
      %60 = arith.index_cast %59 : i32 to index
      %61 = memref.load %arg1[%60] : memref<2048xi32, #tpu.memory_space<smem>>
      %62 = arith.index_cast %61 : i32 to index
      %c0_27 = arith.constant 0 : index
      %63 = vector.load %arg2[%62, %c0_27] : memref<1024x256xf32, #tpu.memory_space<vmem>>, vector<1x256xf32>
      %64 = arith.addf %58, %63 : vector<1x256xf32>
      %c3_i32 = arith.constant 3 : i32
      %65 = arith.addi %48, %c3_i32 : i32
      %66 = arith.index_cast %65 : i32 to index
      %67 = memref.load %arg1[%66] : memref<2048xi32, #tpu.memory_space<smem>>
      %68 = arith.index_cast %67 : i32 to index
      %c0_28 = arith.constant 0 : index
      %69 = vector.load %arg2[%68, %c0_28] : memref<1024x256xf32, #tpu.memory_space<vmem>>, vector<1x256xf32>
      %70 = arith.addf %64, %69 : vector<1x256xf32>
      %c4_i32 = arith.constant 4 : i32
      %71 = arith.addi %48, %c4_i32 : i32
      %72 = arith.index_cast %71 : i32 to index
      %73 = memref.load %arg1[%72] : memref<2048xi32, #tpu.memory_space<smem>>
      %74 = arith.index_cast %73 : i32 to index
      %c0_29 = arith.constant 0 : index
      %75 = vector.load %arg2[%74, %c0_29] : memref<1024x256xf32, #tpu.memory_space<vmem>>, vector<1x256xf32>
      %76 = arith.addf %70, %75 : vector<1x256xf32>
      %c5_i32 = arith.constant 5 : i32
      %77 = arith.addi %48, %c5_i32 : i32
      %78 = arith.index_cast %77 : i32 to index
      %79 = memref.load %arg1[%78] : memref<2048xi32, #tpu.memory_space<smem>>
      %80 = arith.index_cast %79 : i32 to index
      %c0_30 = arith.constant 0 : index
      %81 = vector.load %arg2[%80, %c0_30] : memref<1024x256xf32, #tpu.memory_space<vmem>>, vector<1x256xf32>
      %82 = arith.addf %76, %81 : vector<1x256xf32>
      %c6_i32 = arith.constant 6 : i32
      %83 = arith.addi %48, %c6_i32 : i32
      %84 = arith.index_cast %83 : i32 to index
      %85 = memref.load %arg1[%84] : memref<2048xi32, #tpu.memory_space<smem>>
      %86 = arith.index_cast %85 : i32 to index
      %c0_31 = arith.constant 0 : index
      %87 = vector.load %arg2[%86, %c0_31] : memref<1024x256xf32, #tpu.memory_space<vmem>>, vector<1x256xf32>
      %88 = arith.addf %82, %87 : vector<1x256xf32>
      %c7_i32 = arith.constant 7 : i32
      %89 = arith.addi %48, %c7_i32 : i32
      %90 = arith.index_cast %89 : i32 to index
      %91 = memref.load %arg1[%90] : memref<2048xi32, #tpu.memory_space<smem>>
      %92 = arith.index_cast %91 : i32 to index
      %c0_32 = arith.constant 0 : index
      %93 = vector.load %arg2[%92, %c0_32] : memref<1024x256xf32, #tpu.memory_space<vmem>>, vector<1x256xf32>
      %94 = arith.addf %88, %93 : vector<1x256xf32>
      %c8_i32 = arith.constant 8 : i32
      %95 = arith.addi %48, %c8_i32 : i32
      %96 = arith.index_cast %95 : i32 to index
      %97 = memref.load %arg1[%96] : memref<2048xi32, #tpu.memory_space<smem>>
      %98 = arith.index_cast %97 : i32 to index
      %c0_33 = arith.constant 0 : index
      %99 = vector.load %arg2[%98, %c0_33] : memref<1024x256xf32, #tpu.memory_space<vmem>>, vector<1x256xf32>
      %100 = arith.addf %94, %99 : vector<1x256xf32>
      %c9_i32 = arith.constant 9 : i32
      %101 = arith.addi %48, %c9_i32 : i32
      %102 = arith.index_cast %101 : i32 to index
      %103 = memref.load %arg1[%102] : memref<2048xi32, #tpu.memory_space<smem>>
      %104 = arith.index_cast %103 : i32 to index
      %c0_34 = arith.constant 0 : index
      %105 = vector.load %arg2[%104, %c0_34] : memref<1024x256xf32, #tpu.memory_space<vmem>>, vector<1x256xf32>
      %106 = arith.addf %100, %105 : vector<1x256xf32>
      %c10_i32 = arith.constant 10 : i32
      %107 = arith.addi %48, %c10_i32 : i32
      %108 = arith.index_cast %107 : i32 to index
      %109 = memref.load %arg1[%108] : memref<2048xi32, #tpu.memory_space<smem>>
      %110 = arith.index_cast %109 : i32 to index
      %c0_35 = arith.constant 0 : index
      %111 = vector.load %arg2[%110, %c0_35] : memref<1024x256xf32, #tpu.memory_space<vmem>>, vector<1x256xf32>
      %112 = arith.addf %106, %111 : vector<1x256xf32>
      %c11_i32 = arith.constant 11 : i32
      %113 = arith.addi %48, %c11_i32 : i32
      %114 = arith.index_cast %113 : i32 to index
      %115 = memref.load %arg1[%114] : memref<2048xi32, #tpu.memory_space<smem>>
      %116 = arith.index_cast %115 : i32 to index
      %c0_36 = arith.constant 0 : index
      %117 = vector.load %arg2[%116, %c0_36] : memref<1024x256xf32, #tpu.memory_space<vmem>>, vector<1x256xf32>
      %118 = arith.addf %112, %117 : vector<1x256xf32>
      %c12_i32 = arith.constant 12 : i32
      %119 = arith.addi %48, %c12_i32 : i32
      %120 = arith.index_cast %119 : i32 to index
      %121 = memref.load %arg1[%120] : memref<2048xi32, #tpu.memory_space<smem>>
      %122 = arith.index_cast %121 : i32 to index
      %c0_37 = arith.constant 0 : index
      %123 = vector.load %arg2[%122, %c0_37] : memref<1024x256xf32, #tpu.memory_space<vmem>>, vector<1x256xf32>
      %124 = arith.addf %118, %123 : vector<1x256xf32>
      %c13_i32 = arith.constant 13 : i32
      %125 = arith.addi %48, %c13_i32 : i32
      %126 = arith.index_cast %125 : i32 to index
      %127 = memref.load %arg1[%126] : memref<2048xi32, #tpu.memory_space<smem>>
      %128 = arith.index_cast %127 : i32 to index
      %c0_38 = arith.constant 0 : index
      %129 = vector.load %arg2[%128, %c0_38] : memref<1024x256xf32, #tpu.memory_space<vmem>>, vector<1x256xf32>
      %130 = arith.addf %124, %129 : vector<1x256xf32>
      %c14_i32 = arith.constant 14 : i32
      %131 = arith.addi %48, %c14_i32 : i32
      %132 = arith.index_cast %131 : i32 to index
      %133 = memref.load %arg1[%132] : memref<2048xi32, #tpu.memory_space<smem>>
      %134 = arith.index_cast %133 : i32 to index
      %c0_39 = arith.constant 0 : index
      %135 = vector.load %arg2[%134, %c0_39] : memref<1024x256xf32, #tpu.memory_space<vmem>>, vector<1x256xf32>
      %136 = arith.addf %130, %135 : vector<1x256xf32>
      %c15_i32 = arith.constant 15 : i32
      %137 = arith.addi %48, %c15_i32 : i32
      %138 = arith.index_cast %137 : i32 to index
      %139 = memref.load %arg1[%138] : memref<2048xi32, #tpu.memory_space<smem>>
      %140 = arith.index_cast %139 : i32 to index
      %c0_40 = arith.constant 0 : index
      %141 = vector.load %arg2[%140, %c0_40] : memref<1024x256xf32, #tpu.memory_space<vmem>>, vector<1x256xf32>
      %142 = arith.addf %136, %141 : vector<1x256xf32>
      %143 = arith.index_cast %47 : i32 to index
      %c0_41 = arith.constant 0 : index
      %144 = vector.load %arg9[%143, %c0_41] : memref<128x256xf32, #tpu.memory_space<vmem>>, vector<1x256xf32>
      tpu.vector_store %arg9[%143, %c0_41], %142 {strides = array<i32>} : memref<128x256xf32, #tpu.memory_space<vmem>>, vector<1x256xf32>,
    }
    %c128_i32_0 = arith.constant 128 : i32
    %c0 = arith.constant 0 : index
    %c0_1 = arith.constant 0 : index
    %1 = vector.load %arg9[%c0, %c0_1] : memref<128x256xf32, #tpu.memory_space<vmem>>, vector<128x256xf32>
    %c0_2 = arith.constant 0 : index
    %c0_3 = arith.constant 0 : index
    %2 = vector.load %arg3[%c0_2, %c0_3] : memref<1x256xf32, #tpu.memory_space<vmem>>, vector<1x256xf32>
    %3 = vector.broadcast %2 : vector<1x256xf32> to vector<128x256xf32>
    %4 = arith.addf %1, %3 : vector<128x256xf32>
    %cst = arith.constant dense<0.000000e+00> : vector<256xf32>
    %5 = vector.multi_reduction <add>, %4, %cst [0] : vector<128x256xf32> to vector<256xf32>
    %6 = vector.shape_cast %5 : vector<256xf32> to vector<1x256xf32>
    %cst_4 = arith.constant 1.280000e+02 : f32
    %7 = vector.broadcast %cst_4 : f32 to vector<1x256xf32>
    %8 = arith.divf %6, %7 : vector<1x256xf32>
    %9 = arith.mulf %4, %4 : vector<128x256xf32>
    %cst_5 = arith.constant dense<0.000000e+00> : vector<256xf32>
    %10 = vector.multi_reduction <add>, %9, %cst_5 [0] : vector<128x256xf32> to vector<256xf32>
    %11 = vector.shape_cast %10 : vector<256xf32> to vector<1x256xf32>
    %cst_6 = arith.constant 1.280000e+02 : f32
    %12 = vector.broadcast %cst_6 : f32 to vector<1x256xf32>
    %13 = arith.divf %11, %12 : vector<1x256xf32>
    %14 = arith.mulf %8, %8 : vector<1x256xf32>
    %15 = arith.subf %13, %14 : vector<1x256xf32>
    %c0_7 = arith.constant 0 : index
    %c0_8 = arith.constant 0 : index
    %16 = vector.load %arg4[%c0_7, %c0_8] : memref<1x256xf32, #tpu.memory_space<vmem>>, vector<1x256xf32>
    %cst_9 = arith.constant 9.99999974E-6 : f32
    %17 = vector.broadcast %cst_9 : f32 to vector<1x256xf32>
    %18 = arith.addf %15, %17 : vector<1x256xf32>
    %19 = math.rsqrt %18 : vector<1x256xf32>
    %20 = arith.mulf %16, %19 : vector<1x256xf32>
    %c0_10 = arith.constant 0 : index
    %c0_11 = arith.constant 0 : index
    %21 = vector.load %arg5[%c0_10, %c0_11] : memref<1x256xf32, #tpu.memory_space<vmem>>, vector<1x256xf32>
    %22 = arith.mulf %8, %20 : vector<1x256xf32>
    %23 = arith.subf %21, %22 : vector<1x256xf32>
    %24 = vector.broadcast %20 : vector<1x256xf32> to vector<128x256xf32>
    %25 = arith.mulf %4, %24 : vector<128x256xf32>
    %26 = vector.broadcast %23 : vector<1x256xf32> to vector<128x256xf32>
    %27 = arith.addf %25, %26 : vector<128x256xf32>
    %cst_12 = arith.constant 0.000000e+00 : f32
    %28 = vector.broadcast %cst_12 : f32 to vector<128x256xf32>
    %29 = arith.maximumf %27, %28 : vector<128x256xf32>
    %c0_13 = arith.constant 0 : index
    %c0_14 = arith.constant 0 : index
    %30 = vector.load %arg6[%c0_13, %c0_14] : memref<256x128xf32, #tpu.memory_space<vmem>>, vector<256x128xf32>
    %cst_15 = arith.constant dense<0.000000e+00> : vector<128x128xf32>
    %31 = tpu.matmul %29, %30, %cst_15 {dimension_numbers = #tpu.dot_dimension_numbers<[1], [0], [0], [1], [0, 0, 1, 1], [], []>} : vector<128x256xf32>, vector<256x128xf32>, vector<128x128xf32> -> vector<128x128xf32>
    %c0_16 = arith.constant 0 : index
    %c0_17 = arith.constant 0 : index
    %32 = vector.load %arg7[%c0_16, %c0_17] : memref<1x128xf32, #tpu.memory_space<vmem>>, vector<1x128xf32>
    %33 = vector.broadcast %32 : vector<1x128xf32> to vector<128x128xf32>
    %34 = arith.addf %31, %33 : vector<128x128xf32>
    %cst_18 = arith.constant dense<0xFF800000> : vector<128xf32>
    %35 = vector.multi_reduction <maximumf>, %34, %cst_18 [1] : vector<128x128xf32> to vector<128xf32>
    %36 = vector.shape_cast %35 : vector<128xf32> to vector<128x1xf32>
    %37 = vector.broadcast %36 : vector<128x1xf32> to vector<128x128xf32>
    %38 = arith.subf %34, %37 : vector<128x128xf32>
    %39 = math.exp %38 : vector<128x128xf32>
    %cst_19 = arith.constant dense<0.000000e+00> : vector<128xf32>
    %40 = vector.multi_reduction <add>, %39, %cst_19 [1] : vector<128x128xf32> to vector<128xf32>
    %41 = vector.shape_cast %40 : vector<128xf32> to vector<128x1xf32>
    %42 = tpu.reciprocal %41 {approx = true} : vector<128x1xf32> -> vector<128x1xf32>
    %43 = vector.broadcast %42 : vector<128x1xf32> to vector<128x128xf32>
    %44 = arith.mulf %39, %43 : vector<128x128xf32>
    %c0_20 = arith.constant 0 : index
    %c0_21 = arith.constant 0 : index
    %45 = vector.load %arg8[%c0_20, %c0_21] : memref<128x128xf32, #tpu.memory_space<vmem>>, vector<128x128xf32>
    tpu.vector_store %arg8[%c0_20, %c0_21], %44 {strides = array<i32>} : memref<128x128xf32, #tpu.memory_space<vmem>>, vector<128x128xf32>,
    return
  }
  func.func @transform_0(%arg0: i32, %arg1: memref<2048xi32, #tpu.memory_space<smem>>) -> (i32, i32) {
    %c0_i32 = arith.constant 0 : i32
    %c0_i32_0 = arith.constant 0 : i32
    %c0_i32_1 = arith.constant 0 : i32
    return %c0_i32, %c0_i32_0 : i32, i32
  }
  func.func @transform_1(%arg0: i32, %arg1: memref<2048xi32, #tpu.memory_space<smem>>) -> (i32, i32) {
    %c0_i32 = arith.constant 0 : i32
    %c0_i32_0 = arith.constant 0 : i32
    %c0_i32_1 = arith.constant 0 : i32
    return %c0_i32, %c0_i32_0 : i32, i32
  }
  func.func @transform_2(%arg0: i32, %arg1: memref<2048xi32, #tpu.memory_space<smem>>) -> (i32, i32) {
    %c0_i32 = arith.constant 0 : i32
    %c0_i32_0 = arith.constant 0 : i32
    %c0_i32_1 = arith.constant 0 : i32
    return %c0_i32, %c0_i32_0 : i32, i32
  }
  func.func @transform_3(%arg0: i32, %arg1: memref<2048xi32, #tpu.memory_space<smem>>) -> (i32, i32) {
    %c0_i32 = arith.constant 0 : i32
    %c0_i32_0 = arith.constant 0 : i32
    %c0_i32_1 = arith.constant 0 : i32
    return %c0_i32, %c0_i32_0 : i32, i32
  }
  func.func @transform_4(%arg0: i32, %arg1: memref<2048xi32, #tpu.memory_space<smem>>) -> (i32, i32) {
    %c0_i32 = arith.constant 0 : i32
    %c0_i32_0 = arith.constant 0 : i32
    %c0_i32_1 = arith.constant 0 : i32
    return %c0_i32, %c0_i32_0 : i32, i32
  }
  func.func @transform_5(%arg0: i32, %arg1: memref<2048xi32, #tpu.memory_space<smem>>) -> (i32, i32) {
    %c0_i32 = arith.constant 0 : i32
    %c0_i32_0 = arith.constant 0 : i32
    %c0_i32_1 = arith.constant 0 : i32
    return %c0_i32, %c0_i32_0 : i32, i32
  }
  func.func @transform_6(%arg0: i32, %arg1: memref<2048xi32, #tpu.memory_space<smem>>) -> (i32, i32) {
    %c0_i32 = arith.constant 0 : i32
    %c0_i32_0 = arith.constant 0 : i32
    %c0_i32_1 = arith.constant 0 : i32
    return %c0_i32, %c0_i32_0 : i32, i32
  }
}

</mosaic_0001>

<llo_original>
// kernel: tpu_custom_call.1
$region0: #{tpu_custom_call.1}
  #allocation0 [shape = 'u32[]', space=smem, size = 0x4, offset = 0x4, fixed_abs, tag = 'smem constant byte address 0x4 - core index']
  #allocation1 [shape = 'u32[144,128]{1,0:T(1,128)}', space=vmem, size = 0x12000, scoped, tag = 'internal scratch']
  #allocation2 [shape = 'f32[128,256]{1,0:T(8,128)}', space=vmem, size = 0x20000, scoped, tag = 'scratch operand']
  #allocation3 [shape = 's32[1]{0}', space=sflag, size = 0x4, scoped, tag = 'scoped memory for tpu_custom_call.1']
  #allocation4 [shape = 'u8[8192]{0}', space=smem, size = 0x2000, scoped, tag = 'prefetched SMEM operand 0']
  %s0 = inlined_call_operand.hbm [shape: s32[2048], index: 0, kind: input, shape index: {}]
  %s1 = inlined_call_operand.hbm [shape: f32[1024,256], index: 1, kind: input, shape index: {}]
  %s2 = inlined_call_operand.vmem [shape: f32[1,256], index: 2, kind: input, shape index: {}]
  %s3 = inlined_call_operand.vmem [shape: f32[1,256], index: 3, kind: input, shape index: {}]
  %s4 = inlined_call_operand.vmem [shape: f32[1,256], index: 4, kind: input, shape index: {}]
  %s5 = inlined_call_operand.hbm [shape: f32[256,128], index: 5, kind: input, shape index: {}]
  %s6 = inlined_call_operand.vmem [shape: f32[1,128], index: 6, kind: input, shape index: {}]
  %s7 = inlined_call_operand.hbm [shape: f32[128,128], index: 7, kind: output, shape index: {}]
  %s8 = sld [smem:[#allocation0]]
  $region49: #{tpu_custom_call.1} parent=0
    _
  %s10 = ssub.s32 1, %s8
  %s11 = scalar_select 0, %s10, %s8
  %13 = dma.hbm_to_smem %s0, 256, [#allocation4], [#allocation3]
  %14 = dma.done [#allocation3], 256
  %15 = sfence
  $region1: #{tpu_custom_call.1} parent=0
    #allocation5 [shape = 'u8[1048576]{0}', space=vmem, size = 0x100000, scoped, tag = 'input window, operand 1, single buffered']
    #allocation6 [shape = 's32[1]{0}', space=sflag, size = 0x4, scoped, tag = 'scoped memory for tpu_custom_call.1']
    #allocation7 [shape = 's32[1]{0}', space=sflag, size = 0x4, scoped, tag = 'scoped memory for tpu_custom_call.1']
    #allocation8 [shape = 'u8[131072]{0}', space=vmem, size = 0x20000, scoped, tag = 'input window, operand 5, single buffered']
    #allocation9 [shape = 's32[1]{0}', space=sflag, size = 0x4, scoped, tag = 'scoped memory for tpu_custom_call.1']
    #allocation10 [shape = 'u8[65536]{0}', space=vmem, size = 0x10000, scoped, tag = 'output window, operand 0, single buffered']
    %16 = vsyncpa [#allocation6], 0
    %17 = vsyncpa [#allocation9], 0
    %18 = vsyncpa [#allocation7], 0
    // Predicated region
    $region2: #{tpu_custom_call.1} parent=1 // pred_check
      _
    $region3: #{tpu_custom_call.1} parent=1 // pred_check_branch
      %20 = sbr.rel (0) target = $region5
    $region4: #{tpu_custom_call.1} parent=1 // pred_region
      %s22 = ssub.s32 32768, 32768
      %23 = vsyncadd [#allocation6], %s22
      %s24 = sshll.u32 [#allocation5], 4
      %s25 = int_to_ptr.vmem [resolvable:$true] %s24
      %30 = dma.hbm_to_vmem [thread:$0]  %s1, 32768, %s25, [#allocation6], 256, 256, 16
    $region5: #{tpu_custom_call.1} parent=1 // pred_fallthru
      _
    // Predicated region
    $region6: #{tpu_custom_call.1} parent=1 // pred_check
      _
    $region7: #{tpu_custom_call.1} parent=1 // pred_check_branch
      %32 = sbr.rel (0) target = $region9
    $region8: #{tpu_custom_call.1} parent=1 // pred_region
      _
    $region9: #{tpu_custom_call.1} parent=1 // pred_fallthru
      _
    // Predicated region
    $region10: #{tpu_custom_call.1} parent=1 // pred_check
      _
    $region11: #{tpu_custom_call.1} parent=1 // pred_check_branch
      %34 = sbr.rel (0) target = $region13
    $region12: #{tpu_custom_call.1} parent=1 // pred_region
      _
    $region13: #{tpu_custom_call.1} parent=1 // pred_fallthru
      _
    // Predicated region
    $region14: #{tpu_custom_call.1} parent=1 // pred_check
      _
    $region15: #{tpu_custom_call.1} parent=1 // pred_check_branch
      %36 = sbr.rel (0) target = $region17
    $region16: #{tpu_custom_call.1} parent=1 // pred_region
      _
    $region17: #{tpu_custom_call.1} parent=1 // pred_fallthru
      _
    // Predicated region
    $region18: #{tpu_custom_call.1} parent=1 // pred_check
      _
    $region19: #{tpu_custom_call.1} parent=1 // pred_check_branch
      %38 = sbr.rel (0) target = $region21
    $region20: #{tpu_custom_call.1} parent=1 // pred_region
      %s40 = ssub.s32 4096, 4096
      %41 = vsyncadd [#allocation9], %s40
      %s42 = sshll.u32 [#allocation8], 4
      %s43 = int_to_ptr.vmem [resolvable:$true] %s42
      %48 = dma.hbm_to_vmem [thread:$0]  %s5, 4096, %s43, [#allocation9], 128, 128, 8
    $region21: #{tpu_custom_call.1} parent=1 // pred_fallthru
      _
    // Predicated region
    $region22: #{tpu_custom_call.1} parent=1 // pred_check
      _
    $region23: #{tpu_custom_call.1} parent=1 // pred_check_branch
      %50 = sbr.rel (0) target = $region25
    $region24: #{tpu_custom_call.1} parent=1 // pred_region
      _
    $region25: #{tpu_custom_call.1} parent=1 // pred_fallthru
      _
    // Predicated region
    $region26: #{tpu_custom_call.1} parent=1 // pred_check
      _
    $region27: #{tpu_custom_call.1} parent=1 // pred_check_branch
      %52 = sbr.rel (0) target = $region29
    $region28: #{tpu_custom_call.1} parent=1 // pred_region
      %53 = dma.done [#allocation6], 32768
    $region29: #{tpu_custom_call.1} parent=1 // pred_fallthru
      _
    // Predicated region
    $region30: #{tpu_custom_call.1} parent=1 // pred_check
      _
    $region31: #{tpu_custom_call.1} parent=1 // pred_check_branch
      %55 = sbr.rel (0) target = $region33
    $region32: #{tpu_custom_call.1} parent=1 // pred_region
      %56 = dma.done [#allocation9], 4096
    $region33: #{tpu_custom_call.1} parent=1 // pred_fallthru
      _
    loop: start=0, step=1, limit=128
    $region34: #{tpu_custom_call.1} parent=1 // loop_pre_header
      _
    $region35: #{tpu_custom_call.1} parent=1 // loop_header
      %s58 = sphi 0, %s62
      %p59 = scmp.ge.s32.totalorder %s58, 128
    $region36: #{tpu_custom_call.1} parent=1 // loop_header_branch
      %61 = sbr.rel (%p59) target = $region40
    $region37: #{tpu_custom_call.1} parent=1 // loop_body
      %s63 = smul.u32 %s58, 16
      %s64 = sld [smem:[#allocation4 + %s63]]
      %s65 = sshra.s32 %s64, 3
      %s66 = sand.u32 %s64, 7
      %s67 = sshra.s32 %s64, 3
      %s68 = sand.u32 %s64, 7
      %s69 = smul.u32 %s65, 2
      %s70 = smul.u32 %s69, 8
      %s71 = sadd.s32 %s70, %s68
      %s72 = scalar_lea.vmem [#allocation5], %s71
      %v73 = vld [vmem:[%s72] ss:$8 sm:$0x3]
      %s74 = sadd.s32 %s63, 1
      %s75 = sld [smem:[#allocation4 + %s74]]
      %s76 = sshra.s32 %s75, 3
      %s77 = sand.u32 %s75, 7
      %s78 = sshra.s32 %s75, 3
      %s79 = sand.u32 %s75, 7
      %s80 = smul.u32 %s76, 2
      %s81 = smul.u32 %s80, 8
      %s82 = sadd.s32 %s81, %s79
      %s83 = scalar_lea.vmem [#allocation5], %s82
      %v84 = vld [vmem:[%s83] ss:$8 sm:$0x3]
      %v85 = vadd.f32 %v73, %v84
      %s86 = sadd.s32 %s63, 2
      %s87 = sld [smem:[#allocation4 + %s86]]
      %s88 = sshra.s32 %s87, 3
      %s89 = sand.u32 %s87, 7
      %s90 = sshra.s32 %s87, 3
      %s91 = sand.u32 %s87, 7
      %s92 = smul.u32 %s88, 2
      %s93 = smul.u32 %s92, 8
      %s94 = sadd.s32 %s93, %s91
      %s95 = scalar_lea.vmem [#allocation5], %s94
      %v96 = vld [vmem:[%s95] ss:$8 sm:$0x3]
      %v97 = vadd.f32 %v85, %v96
      %s98 = sadd.s32 %s63, 3
      %s99 = sld [smem:[#allocation4 + %s98]]
      %s100 = sshra.s32 %s99, 3
      %s101 = sand.u32 %s99, 7
      %s102 = sshra.s32 %s99, 3
      %s103 = sand.u32 %s99, 7
      %s104 = smul.u32 %s100, 2
      %s105 = smul.u32 %s104, 8
      %s106 = sadd.s32 %s105, %s103
      %s107 = scalar_lea.vmem [#allocation5], %s106
      %v108 = vld [vmem:[%s107] ss:$8 sm:$0x3]
      %v109 = vadd.f32 %v97, %v108
      %s110 = sadd.s32 %s63, 4
      %s111 = sld [smem:[#allocation4 + %s110]]
      %s112 = sshra.s32 %s111, 3
      %s113 = sand.u32 %s111, 7
      %s114 = sshra.s32 %s111, 3
      %s115 = sand.u32 %s111, 7
      %s116 = smul.u32 %s112, 2
      %s117 = smul.u32 %s116, 8
      %s118 = sadd.s32 %s117, %s115
      %s119 = scalar_lea.vmem [#allocation5], %s118
      %v120 = vld [vmem:[%s119] ss:$8 sm:$0x3]
      %v121 = vadd.f32 %v109, %v120
      %s122 = sadd.s32 %s63, 5
      %s123 = sld [smem:[#allocation4 + %s122]]
      %s124 = sshra.s32 %s123, 3
      %s125 = sand.u32 %s123, 7
      %s126 = sshra.s32 %s123, 3
      %s127 = sand.u32 %s123, 7
      %s128 = smul.u32 %s124, 2
      %s129 = smul.u32 %s128, 8
      %s130 = sadd.s32 %s129, %s127
      %s131 = scalar_lea.vmem [#allocation5], %s130
      %v132 = vld [vmem:[%s131] ss:$8 sm:$0x3]
      %v133 = vadd.f32 %v121, %v132
      %s134 = sadd.s32 %s63, 6
      %s135 = sld [smem:[#allocation4 + %s134]]
      %s136 = sshra.s32 %s135, 3
      %s137 = sand.u32 %s135, 7
      %s138 = sshra.s32 %s135, 3
      %s139 = sand.u32 %s135, 7
      %s140 = smul.u32 %s136, 2
      %s141 = smul.u32 %s140, 8
      %s142 = sadd.s32 %s141, %s139
      %s143 = scalar_lea.vmem [#allocation5], %s142
      %v144 = vld [vmem:[%s143] ss:$8 sm:$0x3]
      %v145 = vadd.f32 %v133, %v144
      %s146 = sadd.s32 %s63, 7
      %s147 = sld [smem:[#allocation4 + %s146]]
      %s148 = sshra.s32 %s147, 3
      %s149 = sand.u32 %s147, 7
      %s150 = sshra.s32 %s147, 3
      %s151 = sand.u32 %s147, 7
      %s152 = smul.u32 %s148, 2
      %s153 = smul.u32 %s152, 8
      %s154 = sadd.s32 %s153, %s151
      %s155 = scalar_lea.vmem [#allocation5], %s154
      %v156 = vld [vmem:[%s155] ss:$8 sm:$0x3]
      %v157 = vadd.f32 %v145, %v156
      %s158 = sadd.s32 %s63, 8
      %s159 = sld [smem:[#allocation4 + %s158]]
      %s160 = sshra.s32 %s159, 3
      %s161 = sand.u32 %s159, 7
      %s162 = sshra.s32 %s159, 3
      %s163 = sand.u32 %s159, 7
      %s164 = smul.u32 %s160, 2
      %s165 = smul.u32 %s164, 8
      %s166 = sadd.s32 %s165, %s163
      %s167 = scalar_lea.vmem [#allocation5], %s166
      %v168 = vld [vmem:[%s167] ss:$8 sm:$0x3]
      %v169 = vadd.f32 %v157, %v168
      %s170 = sadd.s32 %s63, 9
      %s171 = sld [smem:[#allocation4 + %s170]]
      %s172 = sshra.s32 %s171, 3
      %s173 = sand.u32 %s171, 7
      %s174 = sshra.s32 %s171, 3
      %s175 = sand.u32 %s171, 7
      %s176 = smul.u32 %s172, 2
      %s177 = smul.u32 %s176, 8
      %s178 = sadd.s32 %s177, %s175
      %s179 = scalar_lea.vmem [#allocation5], %s178
      %v180 = vld [vmem:[%s179] ss:$8 sm:$0x3]
      %v181 = vadd.f32 %v169, %v180
      %s182 = sadd.s32 %s63, 10
      %s183 = sld [smem:[#allocation4 + %s182]]
      %s184 = sshra.s32 %s183, 3
      %s185 = sand.u32 %s183, 7
      %s186 = sshra.s32 %s183, 3
      %s187 = sand.u32 %s183, 7
      %s188 = smul.u32 %s184, 2
      %s189 = smul.u32 %s188, 8
      %s190 = sadd.s32 %s189, %s187
      %s191 = scalar_lea.vmem [#allocation5], %s190
      %v192 = vld [vmem:[%s191] ss:$8 sm:$0x3]
      %v193 = vadd.f32 %v181, %v192
      %s194 = sadd.s32 %s63, 11
      %s195 = sld [smem:[#allocation4 + %s194]]
      %s196 = sshra.s32 %s195, 3
      %s197 = sand.u32 %s195, 7
      %s198 = sshra.s32 %s195, 3
      %s199 = sand.u32 %s195, 7
      %s200 = smul.u32 %s196, 2
      %s201 = smul.u32 %s200, 8
      %s202 = sadd.s32 %s201, %s199
      %s203 = scalar_lea.vmem [#allocation5], %s202
      %v204 = vld [vmem:[%s203] ss:$8 sm:$0x3]
      %v205 = vadd.f32 %v193, %v204
      %s206 = sadd.s32 %s63, 12
      %s207 = sld [smem:[#allocation4 + %s206]]
      %s208 = sshra.s32 %s207, 3
      %s209 = sand.u32 %s207, 7
      %s210 = sshra.s32 %s207, 3
      %s211 = sand.u32 %s207, 7
      %s212 = smul.u32 %s208, 2
      %s213 = smul.u32 %s212, 8
      %s214 = sadd.s32 %s213, %s211
      %s215 = scalar_lea.vmem [#allocation5], %s214
      %v216 = vld [vmem:[%s215] ss:$8 sm:$0x3]
      %v217 = vadd.f32 %v205, %v216
      %s218 = sadd.s32 %s63, 13
      %s219 = sld [smem:[#allocation4 + %s218]]
      %s220 = sshra.s32 %s219, 3
      %s221 = sand.u32 %s219, 7
      %s222 = sshra.s32 %s219, 3
      %s223 = sand.u32 %s219, 7
      %s224 = smul.u32 %s220, 2
      %s225 = smul.u32 %s224, 8
      %s226 = sadd.s32 %s225, %s223
      %s227 = scalar_lea.vmem [#allocation5], %s226
      %v228 = vld [vmem:[%s227] ss:$8 sm:$0x3]
      %v229 = vadd.f32 %v217, %v228
      %s230 = sadd.s32 %s63, 14
      %s231 = sld [smem:[#allocation4 + %s230]]
      %s232 = sshra.s32 %s231, 3
      %s233 = sand.u32 %s231, 7
      %s234 = sshra.s32 %s231, 3
      %s235 = sand.u32 %s231, 7
      %s236 = smul.u32 %s232, 2
      %s237 = smul.u32 %s236, 8
      %s238 = sadd.s32 %s237, %s235
      %s239 = scalar_lea.vmem [#allocation5], %s238
      %v240 = vld [vmem:[%s239] ss:$8 sm:$0x3]
      %v241 = vadd.f32 %v229, %v240
      %s242 = sadd.s32 %s63, 15
      %s243 = sld [smem:[#allocation4 + %s242]]
      %s244 = sshra.s32 %s243, 3
      %s245 = sand.u32 %s243, 7
      %s246 = sshra.s32 %s243, 3
      %s247 = sand.u32 %s243, 7
      %s248 = smul.u32 %s244, 2
      %s249 = smul.u32 %s248, 8
      %s250 = sadd.s32 %s249, %s247
      %s251 = scalar_lea.vmem [#allocation5], %s250
      %v252 = vld [vmem:[%s251] ss:$8 sm:$0x3]
      %v253 = vadd.f32 %v241, %v252
      %v254 = vlaneseq
      %vm255 = vcmp.ge.s32.totalorder %v254, 0
      %vm256 = vcmp.lt.s32.totalorder %v254, 256
      %vm257 = vmand %vm255, %vm256
      %s258 = sshra.s32 %s58, 3
      %s259 = sand.u32 %s58, 7
      %s260 = sshra.s32 %s58, 3
      %s261 = sand.u32 %s58, 7
      %s262 = smul.u32 %s258, 2
      %s263 = smul.u32 %s262, 8
      %s264 = sadd.s32 %s263, %s261
      %s265 = scalar_lea.vmem [#allocation2], %s264
      %266 = vst.msk [vmem:[%s265] ss:$8 sm:$0x3] %vm257, %v253
      %267 = vst.msk [vmem:[%s265] ss:$8 sm:$0x0] %vm257, %v253
    $region38: #{tpu_custom_call.1} parent=1 // loop_footer
      %s62 = sadd.s32 1, %s58
    $region39: #{tpu_custom_call.1} parent=1 // loop_footer_branch
      %57 = sbr.rel target = $region35
    $region40: #{tpu_custom_call.1} parent=1 // loop_exit
      _
    %v268 = vld [vmem:[#allocation2] sm:$0xff]
    %v269 = vld [vmem:[#allocation2 + $0x8] sm:$0xff]
    %v270 = vld [vmem:[#allocation2 + $0x10] sm:$0xff]
    %v271 = vld [vmem:[#allocation2 + $0x18] sm:$0xff]
    %v272 = vld [vmem:[#allocation2 + $0x20] sm:$0xff]
    %v273 = vld [vmem:[#allocation2 + $0x28] sm:$0xff]
    %v274 = vld [vmem:[#allocation2 + $0x30] sm:$0xff]
    %v275 = vld [vmem:[#allocation2 + $0x38] sm:$0xff]
    %v276 = vld [vmem:[#allocation2 + $0x40] sm:$0xff]
    %v277 = vld [vmem:[#allocation2 + $0x48] sm:$0xff]
    %v278 = vld [vmem:[#allocation2 + $0x50] sm:$0xff]
    %v279 = vld [vmem:[#allocation2 + $0x58] sm:$0xff]
    %v280 = vld [vmem:[#allocation2 + $0x60] sm:$0xff]
    %v281 = vld [vmem:[#allocation2 + $0x68] sm:$0xff]
    %v282 = vld [vmem:[#allocation2 + $0x70] sm:$0xff]
    %v283 = vld [vmem:[#allocation2 + $0x78] sm:$0xff]
    %v284 = vld [vmem:[#allocation2 + $0x80] sm:$0xff]
    %v285 = vld [vmem:[#allocation2 + $0x88] sm:$0xff]
    %v286 = vld [vmem:[#allocation2 + $0x90] sm:$0xff]
    %v287 = vld [vmem:[#allocation2 + $0x98] sm:$0xff]
    %v288 = vld [vmem:[#allocation2 + $0xa0] sm:$0xff]
    %v289 = vld [vmem:[#allocation2 + $0xa8] sm:$0xff]
    %v290 = vld [vmem:[#allocation2 + $0xb0] sm:$0xff]
    %v291 = vld [vmem:[#allocation2 + $0xb8] sm:$0xff]
    %v292 = vld [vmem:[#allocation2 + $0xc0] sm:$0xff]
    %v293 = vld [vmem:[#allocation2 + $0xc8] sm:$0xff]
    %v294 = vld [vmem:[#allocation2 + $0xd0] sm:$0xff]
    %v295 = vld [vmem:[#allocation2 + $0xd8] sm:$0xff]
    %v296 = vld [vmem:[#allocation2 + $0xe0] sm:$0xff]
    %v297 = vld [vmem:[#allocation2 + $0xe8] sm:$0xff]
    %v298 = vld [vmem:[#allocation2 + $0xf0] sm:$0xff]
    %v299 = vld [vmem:[#allocation2 + $0xf8] sm:$0xff]
    %v300 = vld [vmem:[%s2] sm:$0x3]
    %v302 = vlaneseq
    %v303 = vshrl.u32 %v302, 7
    %v304 = vsub.s32 0, %v303
    %v305 = vrot.slane %v300, %v304
    %v306 = vlaneseq
    %v307 = vshrl.u32 %v306, 7
    %v308 = vsub.s32 1, %v307
    %v309 = vrot.slane %v300, %v308
    %v312 = vadd.f32 %v268, %v305
    %v313 = vadd.f32 %v269, %v309
    %v314 = vadd.f32 %v270, %v305
    %v315 = vadd.f32 %v271, %v309
    %v316 = vadd.f32 %v272, %v305
    %v317 = vadd.f32 %v273, %v309
    %v318 = vadd.f32 %v274, %v305
    %v319 = vadd.f32 %v275, %v309
    %v320 = vadd.f32 %v276, %v305
    %v321 = vadd.f32 %v277, %v309
    %v322 = vadd.f32 %v278, %v305
    %v323 = vadd.f32 %v279, %v309
    %v324 = vadd.f32 %v280, %v305
    %v325 = vadd.f32 %v281, %v309
    %v326 = vadd.f32 %v282, %v305
    %v327 = vadd.f32 %v283, %v309
    %v328 = vadd.f32 %v284, %v305
    %v329 = vadd.f32 %v285, %v309
    %v330 = vadd.f32 %v286, %v305
    %v331 = vadd.f32 %v287, %v309
    %v332 = vadd.f32 %v288, %v305
    %v333 = vadd.f32 %v289, %v309
    %v334 = vadd.f32 %v290, %v305
    %v335 = vadd.f32 %v291, %v309
    %v336 = vadd.f32 %v292, %v305
    %v337 = vadd.f32 %v293, %v309
    %v338 = vadd.f32 %v294, %v305
    %v339 = vadd.f32 %v295, %v309
    %v340 = vadd.f32 %v296, %v305
    %v341 = vadd.f32 %v297, %v309
    %v342 = vadd.f32 %v298, %v305
    %v343 = vadd.f32 %v299, %v309
    %v344 = vadd.f32 %v312, %v314
    %v345 = vadd.f32 %v344, %v316
    %v346 = vadd.f32 %v345, %v318
    %v347 = vadd.f32 %v346, %v320
    %v348 = vadd.f32 %v347, %v322
    %v349 = vadd.f32 %v348, %v324
    %v350 = vadd.f32 %v349, %v326
    %v351 = vadd.f32 %v350, %v328
    %v352 = vadd.f32 %v351, %v330
    %v353 = vadd.f32 %v352, %v332
    %v354 = vadd.f32 %v353, %v334
    %v355 = vadd.f32 %v354, %v336
    %v356 = vadd.f32 %v355, %v338
    %v357 = vadd.f32 %v356, %v340
    %v358 = vadd.f32 %v357, %v342
    %v359 = vrot.slane %v358, 4
    %v360 = vadd.f32 %v358, %v359
    %v361 = vrot.slane %v360, 2
    %v362 = vadd.f32 %v360, %v361
    %v363 = vrot.slane %v362, 1
    %v364 = vadd.f32 %v362, %v363
    %v365 = vadd.f32 %v313, %v315
    %v366 = vadd.f32 %v365, %v317
    %v367 = vadd.f32 %v366, %v319
    %v368 = vadd.f32 %v367, %v321
    %v369 = vadd.f32 %v368, %v323
    %v370 = vadd.f32 %v369, %v325
    %v371 = vadd.f32 %v370, %v327
    %v372 = vadd.f32 %v371, %v329
    %v373 = vadd.f32 %v372, %v331
    %v374 = vadd.f32 %v373, %v333
    %v375 = vadd.f32 %v374, %v335
    %v376 = vadd.f32 %v375, %v337
    %v377 = vadd.f32 %v376, %v339
    %v378 = vadd.f32 %v377, %v341
    %v379 = vadd.f32 %v378, %v343
    %v380 = vrot.slane %v379, 4
    %v381 = vadd.f32 %v379, %v380
    %v382 = vrot.slane %v381, 2
    %v383 = vadd.f32 %v381, %v382
    %v384 = vrot.slane %v383, 1
    %v385 = vadd.f32 %v383, %v384
    %v386 = vrcp.pop 128.0
    %v387 = vmul.f32 %v364, %v386
    %v388 = vmul.f32 %v385, %v386
    %v389 = vmul.f32 %v312, %v312
    %v390 = vmul.f32 %v313, %v313
    %v391 = vmul.f32 %v314, %v314
    %v392 = vmul.f32 %v315, %v315
    %v393 = vmul.f32 %v316, %v316
    %v394 = vmul.f32 %v317, %v317
    %v395 = vmul.f32 %v318, %v318
    %v396 = vmul.f32 %v319, %v319
    %v397 = vmul.f32 %v320, %v320
    %v398 = vmul.f32 %v321, %v321
    %v399 = vmul.f32 %v322, %v322
    %v400 = vmul.f32 %v323, %v323
    %v401 = vmul.f32 %v324, %v324
    %v402 = vmul.f32 %v325, %v325
    %v403 = vmul.f32 %v326, %v326
    %v404 = vmul.f32 %v327, %v327
    %v405 = vmul.f32 %v328, %v328
    %v406 = vmul.f32 %v329, %v329
    %v407 = vmul.f32 %v330, %v330
    %v408 = vmul.f32 %v331, %v331
    %v409 = vmul.f32 %v332, %v332
    %v410 = vmul.f32 %v333, %v333
    %v411 = vmul.f32 %v334, %v334
    %v412 = vmul.f32 %v335, %v335
    %v413 = vmul.f32 %v336, %v336
    %v414 = vmul.f32 %v337, %v337
    %v415 = vmul.f32 %v338, %v338
    %v416 = vmul.f32 %v339, %v339
    %v417 = vmul.f32 %v340, %v340
    %v418 = vmul.f32 %v341, %v341
    %v419 = vmul.f32 %v342, %v342
    %v420 = vmul.f32 %v343, %v343
    %v421 = vadd.f32 %v389, %v391
    %v422 = vadd.f32 %v421, %v393
    %v423 = vadd.f32 %v422, %v395
    %v424 = vadd.f32 %v423, %v397
    %v425 = vadd.f32 %v424, %v399
    %v426 = vadd.f32 %v425, %v401
    %v427 = vadd.f32 %v426, %v403
    %v428 = vadd.f32 %v427, %v405
    %v429 = vadd.f32 %v428, %v407
    %v430 = vadd.f32 %v429, %v409
    %v431 = vadd.f32 %v430, %v411
    %v432 = vadd.f32 %v431, %v413
    %v433 = vadd.f32 %v432, %v415
    %v434 = vadd.f32 %v433, %v417
    %v435 = vadd.f32 %v434, %v419
    %v436 = vrot.slane %v435, 4
    %v437 = vadd.f32 %v435, %v436
    %v438 = vrot.slane %v437, 2
    %v439 = vadd.f32 %v437, %v438
    %v440 = vrot.slane %v439, 1
    %v441 = vadd.f32 %v439, %v440
    %v442 = vadd.f32 %v390, %v392
    %v443 = vadd.f32 %v442, %v394
    %v444 = vadd.f32 %v443, %v396
    %v445 = vadd.f32 %v444, %v398
    %v446 = vadd.f32 %v445, %v400
    %v447 = vadd.f32 %v446, %v402
    %v448 = vadd.f32 %v447, %v404
    %v449 = vadd.f32 %v448, %v406
    %v450 = vadd.f32 %v449, %v408
    %v451 = vadd.f32 %v450, %v410
    %v452 = vadd.f32 %v451, %v412
    %v453 = vadd.f32 %v452, %v414
    %v454 = vadd.f32 %v453, %v416
    %v455 = vadd.f32 %v454, %v418
    %v456 = vadd.f32 %v455, %v420
    %v457 = vrot.slane %v456, 4
    %v458 = vadd.f32 %v456, %v457
    %v459 = vrot.slane %v458, 2
    %v460 = vadd.f32 %v458, %v459
    %v461 = vrot.slane %v460, 1
    %v462 = vadd.f32 %v460, %v461
    %v463 = vmul.f32 %v441, %v386
    %v464 = vmul.f32 %v462, %v386
    %v465 = vmul.f32 %v387, %v387
    %v466 = vmul.f32 %v388, %v388
    %v467 = vsub.f32 %v463, %v465
    %v468 = vsub.f32 %v464, %v466
    %v469 = vld [vmem:[%s3] sm:$0x3]
    %v470 = vadd.f32 %v467, 1e-05
    %v471 = vadd.f32 %v468, 1e-05
    %v472 = vrsqrt.pop %v470
    %v473 = vrsqrt.pop %v471
    %v476 = vcombine.low %v472, %v473
    %v478 = vunpack.c.l.s4 1966171168
    %v479 = vunpack.c.0.s8 %v478
    %v480 = vlaneseq
    %v481 = vshrl.u32 %v480, 7
    %v482 = vsub.s32 %v479, %v481
    %v483 = vrot.slane %v476, %v482
    %v485 = vunpack.c.l.s4 1966171168
    %v486 = vunpack.c.0.s8 %v485
    %v487 = vlaneseq
    %v488 = vshrl.u32 %v487, 7
    %v489 = vsub.s32 %v486, %v488
    %v490 = vrot.slane %v483, %v489
    %v492 = vmul.f32 %v469, %v490
    %v493 = vld [vmem:[%s4] sm:$0x3]
    %v495 = vlaneseq
    %v496 = vshrl.u32 %v495, 7
    %v497 = vsub.s32 0, %v496
    %v498 = vrot.slane %v492, %v497
    %v499 = vlaneseq
    %v500 = vshrl.u32 %v499, 7
    %v501 = vsub.s32 1, %v500
    %v502 = vrot.slane %v492, %v501
    %v505 = vmul.f32 %v387, %v498
    %v506 = vmul.f32 %v388, %v502
    %v509 = vcombine.low %v505, %v506
    %v511 = vunpack.c.l.s4 1966171168
    %v512 = vunpack.c.0.s8 %v511
    %v513 = vlaneseq
    %v514 = vshrl.u32 %v513, 7
    %v515 = vsub.s32 %v512, %v514
    %v516 = vrot.slane %v509, %v515
    %v518 = vunpack.c.l.s4 1966171168
    %v519 = vunpack.c.0.s8 %v518
    %v520 = vlaneseq
    %v521 = vshrl.u32 %v520, 7
    %v522 = vsub.s32 %v519, %v521
    %v523 = vrot.slane %v516, %v522
    %v525 = vsub.f32 %v493, %v523
    %v526 = vmul.f32 %v312, %v498
    %v527 = vmul.f32 %v313, %v502
    %v528 = vmul.f32 %v314, %v498
    %v529 = vmul.f32 %v315, %v502
    %v530 = vmul.f32 %v316, %v498
    %v531 = vmul.f32 %v317, %v502
    %v532 = vmul.f32 %v318, %v498
    %v533 = vmul.f32 %v319, %v502
    %v534 = vmul.f32 %v320, %v498
    %v535 = vmul.f32 %v321, %v502
    %v536 = vmul.f32 %v322, %v498
    %v537 = vmul.f32 %v323, %v502
    %v538 = vmul.f32 %v324, %v498
    %v539 = vmul.f32 %v325, %v502
    %v540 = vmul.f32 %v326, %v498
    %v541 = vmul.f32 %v327, %v502
    %v542 = vmul.f32 %v328, %v498
    %v543 = vmul.f32 %v329, %v502
    %v544 = vmul.f32 %v330, %v498
    %v545 = vmul.f32 %v331, %v502
    %v546 = vmul.f32 %v332, %v498
    %v547 = vmul.f32 %v333, %v502
    %v548 = vmul.f32 %v334, %v498
    %v549 = vmul.f32 %v335, %v502
    %v550 = vmul.f32 %v336, %v498
    %v551 = vmul.f32 %v337, %v502
    %v552 = vmul.f32 %v338, %v498
    %v553 = vmul.f32 %v339, %v502
    %v554 = vmul.f32 %v340, %v498
    %v555 = vmul.f32 %v341, %v502
    %v556 = vmul.f32 %v342, %v498
    %v557 = vmul.f32 %v343, %v502
    %v559 = vlaneseq
    %v560 = vshrl.u32 %v559, 7
    %v561 = vsub.s32 0, %v560
    %v562 = vrot.slane %v525, %v561
    %v563 = vlaneseq
    %v564 = vshrl.u32 %v563, 7
    %v565 = vsub.s32 1, %v564
    %v566 = vrot.slane %v525, %v565
    %v569 = vadd.f32 %v526, %v562
    %v570 = vadd.f32 %v527, %v566
    %v571 = vadd.f32 %v528, %v562
    %v572 = vadd.f32 %v529, %v566
    %v573 = vadd.f32 %v530, %v562
    %v574 = vadd.f32 %v531, %v566
    %v575 = vadd.f32 %v532, %v562
    %v576 = vadd.f32 %v533, %v566
    %v577 = vadd.f32 %v534, %v562
    %v578 = vadd.f32 %v535, %v566
    %v579 = vadd.f32 %v536, %v562
    %v580 = vadd.f32 %v537, %v566
    %v581 = vadd.f32 %v538, %v562
    %v582 = vadd.f32 %v539, %v566
    %v583 = vadd.f32 %v540, %v562
    %v584 = vadd.f32 %v541, %v566
    %v585 = vadd.f32 %v542, %v562
    %v586 = vadd.f32 %v543, %v566
    %v587 = vadd.f32 %v544, %v562
    %v588 = vadd.f32 %v545, %v566
    %v589 = vadd.f32 %v546, %v562
    %v590 = vadd.f32 %v547, %v566
    %v591 = vadd.f32 %v548, %v562
    %v592 = vadd.f32 %v549, %v566
    %v593 = vadd.f32 %v550, %v562
    %v594 = vadd.f32 %v551, %v566
    %v595 = vadd.f32 %v552, %v562
    %v596 = vadd.f32 %v553, %v566
    %v597 = vadd.f32 %v554, %v562
    %v598 = vadd.f32 %v555, %v566
    %v599 = vadd.f32 %v556, %v562
    %v600 = vadd.f32 %v557, %v566
    %v601 = vmax.f32 %v569, 0.0
    %v602 = vmax.f32 %v570, 0.0
    %v603 = vmax.f32 %v571, 0.0
    %v604 = vmax.f32 %v572, 0.0
    %v605 = vmax.f32 %v573, 0.0
    %v606 = vmax.f32 %v574, 0.0
    %v607 = vmax.f32 %v575, 0.0
    %v608 = vmax.f32 %v576, 0.0
    %v609 = vmax.f32 %v577, 0.0
    %v610 = vmax.f32 %v578, 0.0
    %v611 = vmax.f32 %v579, 0.0
    %v612 = vmax.f32 %v580, 0.0
    %v613 = vmax.f32 %v581, 0.0
    %v614 = vmax.f32 %v582, 0.0
    %v615 = vmax.f32 %v583, 0.0
    %v616 = vmax.f32 %v584, 0.0
    %v617 = vmax.f32 %v585, 0.0
    %v618 = vmax.f32 %v586, 0.0
    %v619 = vmax.f32 %v587, 0.0
    %v620 = vmax.f32 %v588, 0.0
    %v621 = vmax.f32 %v589, 0.0
    %v622 = vmax.f32 %v590, 0.0
    %v623 = vmax.f32 %v591, 0.0
    %v624 = vmax.f32 %v592, 0.0
    %v625 = vmax.f32 %v593, 0.0
    %v626 = vmax.f32 %v594, 0.0
    %v627 = vmax.f32 %v595, 0.0
    %v628 = vmax.f32 %v596, 0.0
    %v629 = vmax.f32 %v597, 0.0
    %v630 = vmax.f32 %v598, 0.0
    %v631 = vmax.f32 %v599, 0.0
    %v632 = vmax.f32 %v600, 0.0
    %v633 = vld [vmem:[#allocation8] sm:$0xff]
    %v634 = vld [vmem:[#allocation8 + $0x8] sm:$0xff]
    %v635 = vld [vmem:[#allocation8 + $0x10] sm:$0xff]
    %v636 = vld [vmem:[#allocation8 + $0x18] sm:$0xff]
    %v637 = vld [vmem:[#allocation8 + $0x20] sm:$0xff]
    %v638 = vld [vmem:[#allocation8 + $0x28] sm:$0xff]
    %v639 = vld [vmem:[#allocation8 + $0x30] sm:$0xff]
    %v640 = vld [vmem:[#allocation8 + $0x38] sm:$0xff]
    %v641 = vld [vmem:[#allocation8 + $0x40] sm:$0xff]
    %v642 = vld [vmem:[#allocation8 + $0x48] sm:$0xff]
    %v643 = vld [vmem:[#allocation8 + $0x50] sm:$0xff]
    %v644 = vld [vmem:[#allocation8 + $0x58] sm:$0xff]
    %v645 = vld [vmem:[#allocation8 + $0x60] sm:$0xff]
    %v646 = vld [vmem:[#allocation8 + $0x68] sm:$0xff]
    %v647 = vld [vmem:[#allocation8 + $0x70] sm:$0xff]
    %v648 = vld [vmem:[#allocation8 + $0x78] sm:$0xff]
    %v649 = vld [vmem:[#allocation8 + $0x80] sm:$0xff]
    %v650 = vld [vmem:[#allocation8 + $0x88] sm:$0xff]
    %v651 = vld [vmem:[#allocation8 + $0x90] sm:$0xff]
    %v652 = vld [vmem:[#allocation8 + $0x98] sm:$0xff]
    %v653 = vld [vmem:[#allocation8 + $0xa0] sm:$0xff]
    %v654 = vld [vmem:[#allocation8 + $0xa8] sm:$0xff]
    %v655 = vld [vmem:[#allocation8 + $0xb0] sm:$0xff]
    %v656 = vld [vmem:[#allocation8 + $0xb8] sm:$0xff]
    %v657 = vld [vmem:[#allocation8 + $0xc0] sm:$0xff]
    %v658 = vld [vmem:[#allocation8 + $0xc8] sm:$0xff]
    %v659 = vld [vmem:[#allocation8 + $0xd0] sm:$0xff]
    %v660 = vld [vmem:[#allocation8 + $0xd8] sm:$0xff]
    %v661 = vld [vmem:[#allocation8 + $0xe0] sm:$0xff]
    %v662 = vld [vmem:[#allocation8 + $0xe8] sm:$0xff]
    %v663 = vld [vmem:[#allocation8 + $0xf0] sm:$0xff]
    %v664 = vld [vmem:[#allocation8 + $0xf8] sm:$0xff]
    %v665 = vld [vmem:[%s6] sm:$0x1]
    %v667 = vlaneseq
    %v668 = vshrl.u32 %v667, 7
    %v669 = vsub.s32 0, %v668
    %v670 = vrot.slane %v665, %v669
    %672 = vmatprep.subr.mxu0 0.0
    %673 = vmatpush1.msra.mxu0 %v648
    %674 = vmatprep.subr.mxu0 0.0
    %675 = vmatpush1.msra.mxu0 %v647
    %676 = vmatprep.subr.mxu0 0.0
    %677 = vmatpush1.msra.mxu0 %v646
    %678 = vmatprep.subr.mxu0 0.0
    %679 = vmatpush1.msra.mxu0 %v645
    %680 = vmatprep.subr.mxu0 0.0
    %681 = vmatpush1.msra.mxu0 %v644
    %682 = vmatprep.subr.mxu0 0.0
    %683 = vmatpush1.msra.mxu0 %v643
    %684 = vmatprep.subr.mxu0 0.0
    %685 = vmatpush1.msra.mxu0 %v642
    %686 = vmatprep.subr.mxu0 0.0
    %687 = vmatpush1.msra.mxu0 %v641
    %688 = vmatprep.subr.mxu0 0.0
    %689 = vmatpush1.msra.mxu0 %v640
    %690 = vmatprep.subr.mxu0 0.0
    %691 = vmatpush1.msra.mxu0 %v639
    %692 = vmatprep.subr.mxu0 0.0
    %693 = vmatpush1.msra.mxu0 %v638
    %694 = vmatprep.subr.mxu0 0.0
    %695 = vmatpush1.msra.mxu0 %v637
    %696 = vmatprep.subr.mxu0 0.0
    %697 = vmatpush1.msra.mxu0 %v636
    %698 = vmatprep.subr.mxu0 0.0
    %699 = vmatpush1.msra.mxu0 %v635
    %700 = vmatprep.subr.mxu0 0.0
    %701 = vmatpush1.msra.mxu0 %v634
    %702 = vmatprep.subr.mxu0 0.0
    %703 = vmatpush1.msra.mxu0 %v633
    %704 = vmatprep.subr.mxu0 0.0
    %705 = vmatpush2.msra.mxu0 %v664
    %706 = vmatprep.subr.mxu0 0.0
    %707 = vmatpush2.msra.mxu0 %v663
    %708 = vmatprep.subr.mxu0 0.0
    %709 = vmatpush2.msra.mxu0 %v662
    %710 = vmatprep.subr.mxu0 0.0
    %711 = vmatpush2.msra.mxu0 %v661
    %712 = vmatprep.subr.mxu0 0.0
    %713 = vmatpush2.msra.mxu0 %v660
    %714 = vmatprep.subr.mxu0 0.0
    %715 = vmatpush2.msra.mxu0 %v659
    %716 = vmatprep.subr.mxu0 0.0
    %717 = vmatpush2.msra.mxu0 %v658
    %718 = vmatprep.subr.mxu0 0.0
    %719 = vmatpush2.msra.mxu0 %v657
    %720 = vmatprep.subr.mxu0 0.0
    %721 = vmatpush2.msra.mxu0 %v656
    %722 = vmatprep.subr.mxu0 0.0
    %723 = vmatpush2.msra.mxu0 %v655
    %724 = vmatprep.subr.mxu0 0.0
    %725 = vmatpush2.msra.mxu0 %v654
    %726 = vmatprep.subr.mxu0 0.0
    %727 = vmatpush2.msra.mxu0 %v653
    %728 = vmatprep.subr.mxu0 0.0
    %729 = vmatpush2.msra.mxu0 %v652
    %730 = vmatprep.subr.mxu0 0.0
    %731 = vmatpush2.msra.mxu0 %v651
    %732 = vmatprep.subr.mxu0 0.0
    %733 = vmatpush2.msra.mxu0 %v650
    %734 = vmatprep.subr.mxu0 0.0
    %735 = vmatpush2.msra.mxu0 %v649
    %736 = vmatprep.mubr.f32.mxu0 %v602
    %737 = vmatmul.mubr.f32.gmra.mxu0 %v601
    %v738 = vpop.f32.mrf.mxu0
    %v739 = vadd.f32 %v670, %v738
    %v740 = vpop.f32.mrf.mxu0
    %741 = vmatprep.mubr.f32.mxu0 %v604
    %742 = vmatmul.mubr.f32.gmra.mxu0 %v603
    %v743 = vpop.f32.mrf.mxu0
    %v744 = vadd.f32 %v670, %v743
    %v745 = vpop.f32.mrf.mxu0
    %746 = vmatprep.mubr.f32.mxu0 %v606
    %747 = vmatmul.mubr.f32.gmra.mxu0 %v605
    %v748 = vpop.f32.mrf.mxu0
    %v749 = vadd.f32 %v670, %v748
    %v750 = vpop.f32.mrf.mxu0
    %751 = vmatprep.mubr.f32.mxu0 %v608
    %752 = vmatmul.mubr.f32.gmra.mxu0 %v607
    %v753 = vpop.f32.mrf.mxu0
    %v754 = vadd.f32 %v670, %v753
    %v755 = vpop.f32.mrf.mxu0
    %756 = vmatprep.mubr.f32.mxu0 %v610
    %757 = vmatmul.mubr.f32.gmra.mxu0 %v609
    %v758 = vpop.f32.mrf.mxu0
    %v759 = vadd.f32 %v670, %v758
    %v760 = vpop.f32.mrf.mxu0
    %761 = vmatprep.mubr.f32.mxu0 %v612
    %762 = vmatmul.mubr.f32.gmra.mxu0 %v611
    %v763 = vpop.f32.mrf.mxu0
    %v764 = vadd.f32 %v670, %v763
    %v765 = vpop.f32.mrf.mxu0
    %766 = vmatprep.mubr.f32.mxu0 %v614
    %767 = vmatmul.mubr.f32.gmra.mxu0 %v613
    %v768 = vpop.f32.mrf.mxu0
    %v769 = vadd.f32 %v670, %v768
    %v770 = vpop.f32.mrf.mxu0
    %771 = vmatprep.mubr.f32.mxu0 %v616
    %772 = vmatmul.mubr.f32.gmra.mxu0 %v615
    %v773 = vpop.f32.mrf.mxu0
    %v774 = vadd.f32 %v670, %v773
    %v775 = vpop.f32.mrf.mxu0
    %776 = vmatprep.mubr.f32.mxu0 %v618
    %777 = vmatmul.mubr.f32.gmra.mxu0 %v617
    %v778 = vpop.f32.mrf.mxu0
    %v779 = vadd.f32 %v670, %v778
    %v780 = vpop.f32.mrf.mxu0
    %781 = vmatprep.mubr.f32.mxu0 %v620
    %782 = vmatmul.mubr.f32.gmra.mxu0 %v619
    %v783 = vpop.f32.mrf.mxu0
    %v784 = vadd.f32 %v670, %v783
    %v785 = vpop.f32.mrf.mxu0
    %786 = vmatprep.mubr.f32.mxu0 %v622
    %787 = vmatmul.mubr.f32.gmra.mxu0 %v621
    %v788 = vpop.f32.mrf.mxu0
    %v789 = vadd.f32 %v670, %v788
    %v790 = vpop.f32.mrf.mxu0
    %791 = vmatprep.mubr.f32.mxu0 %v624
    %792 = vmatmul.mubr.f32.gmra.mxu0 %v623
    %v793 = vpop.f32.mrf.mxu0
    %v794 = vadd.f32 %v670, %v793
    %v795 = vpop.f32.mrf.mxu0
    %796 = vmatprep.mubr.f32.mxu0 %v626
    %797 = vmatmul.mubr.f32.gmra.mxu0 %v625
    %v798 = vpop.f32.mrf.mxu0
    %v799 = vadd.f32 %v670, %v798
    %v800 = vpop.f32.mrf.mxu0
    %801 = vmatprep.mubr.f32.mxu0 %v628
    %802 = vmatmul.mubr.f32.gmra.mxu0 %v627
    %v803 = vpop.f32.mrf.mxu0
    %v804 = vadd.f32 %v670, %v803
    %v805 = vpop.f32.mrf.mxu0
    %806 = vmatprep.mubr.f32.mxu0 %v630
    %807 = vmatmul.mubr.f32.gmra.mxu0 %v629
    %v808 = vpop.f32.mrf.mxu0
    %v809 = vadd.f32 %v670, %v808
    %v810 = vpop.f32.mrf.mxu0
    %811 = vmatprep.mubr.f32.mxu0 %v632
    %812 = vmatmul.mubr.f32.gmra.mxu0 %v631
    %v813 = vpop.f32.mrf.mxu0
    %v814 = vadd.f32 %v670, %v813
    %v815 = vpop.f32.mrf.mxu0
    %816 = vdwg.mxu0
    %817 = vmax.xlane.f32.xlu0 %v739
    %v818 = vpop.xlane.xlu0 %817
    %819 = vmax.xlane.f32.xlu0 %v744
    %v820 = vpop.xlane.xlu0 %819
    %821 = vmax.xlane.f32.xlu0 %v749
    %v822 = vpop.xlane.xlu0 %821
    %823 = vmax.xlane.f32.xlu0 %v754
    %v824 = vpop.xlane.xlu0 %823
    %825 = vmax.xlane.f32.xlu0 %v759
    %v826 = vpop.xlane.xlu0 %825
    %827 = vmax.xlane.f32.xlu0 %v764
    %v828 = vpop.xlane.xlu0 %827
    %829 = vmax.xlane.f32.xlu0 %v769
    %v830 = vpop.xlane.xlu0 %829
    %831 = vmax.xlane.f32.xlu0 %v774
    %v832 = vpop.xlane.xlu0 %831
    %833 = vmax.xlane.f32.xlu0 %v779
    %v834 = vpop.xlane.xlu0 %833
    %835 = vmax.xlane.f32.xlu0 %v784
    %v836 = vpop.xlane.xlu0 %835
    %837 = vmax.xlane.f32.xlu0 %v789
    %v838 = vpop.xlane.xlu0 %837
    %839 = vmax.xlane.f32.xlu0 %v794
    %v840 = vpop.xlane.xlu0 %839
    %841 = vmax.xlane.f32.xlu0 %v799
    %v842 = vpop.xlane.xlu0 %841
    %843 = vmax.xlane.f32.xlu0 %v804
    %v844 = vpop.xlane.xlu0 %843
    %845 = vmax.xlane.f32.xlu0 %v809
    %v846 = vpop.xlane.xlu0 %845
    %847 = vmax.xlane.f32.xlu0 %v814
    %v848 = vpop.xlane.xlu0 %847
    %v849 = vsub.f32 %v739, %v818
    %v850 = vsub.f32 %v744, %v820
    %v851 = vsub.f32 %v749, %v822
    %v852 = vsub.f32 %v754, %v824
    %v853 = vsub.f32 %v759, %v826
    %v854 = vsub.f32 %v764, %v828
    %v855 = vsub.f32 %v769, %v830
    %v856 = vsub.f32 %v774, %v832
    %v857 = vsub.f32 %v779, %v834
    %v858 = vsub.f32 %v784, %v836
    %v859 = vsub.f32 %v789, %v838
    %v860 = vsub.f32 %v794, %v840
    %v861 = vsub.f32 %v799, %v842
    %v862 = vsub.f32 %v804, %v844
    %v863 = vsub.f32 %v809, %v846
    %v864 = vsub.f32 %v814, %v848
    %v865 = vmul.f32 %v849, 1.442695
    %v866 = vpow.pop %v865
    %v867 = vmul.f32 %v850, 1.442695
    %v868 = vpow.pop %v867
    %v869 = vmul.f32 %v851, 1.442695
    %v870 = vpow.pop %v869
    %v871 = vmul.f32 %v852, 1.442695
    %v872 = vpow.pop %v871
    %v873 = vmul.f32 %v853, 1.442695
    %v874 = vpow.pop %v873
    %v875 = vmul.f32 %v854, 1.442695
    %v876 = vpow.pop %v875
    %v877 = vmul.f32 %v855, 1.442695
    %v878 = vpow.pop %v877
    %v879 = vmul.f32 %v856, 1.442695
    %v880 = vpow.pop %v879
    %v881 = vmul.f32 %v857, 1.442695
    %v882 = vpow.pop %v881
    %v883 = vmul.f32 %v858, 1.442695
    %v884 = vpow.pop %v883
    %v885 = vmul.f32 %v859, 1.442695
    %v886 = vpow.pop %v885
    %v887 = vmul.f32 %v860, 1.442695
    %v888 = vpow.pop %v887
    %v889 = vmul.f32 %v861, 1.442695
    %v890 = vpow.pop %v889
    %v891 = vmul.f32 %v862, 1.442695
    %v892 = vpow.pop %v891
    %v893 = vmul.f32 %v863, 1.442695
    %v894 = vpow.pop %v893
    %v895 = vmul.f32 %v864, 1.442695
    %v896 = vpow.pop %v895
    %897 = vadd.xlane.f32.xlu0 %v866
    %v898 = vpop.xlane.xlu0 %897
    %899 = vadd.xlane.f32.xlu0 %v868
    %v900 = vpop.xlane.xlu0 %899
    %901 = vadd.xlane.f32.xlu0 %v870
    %v902 = vpop.xlane.xlu0 %901
    %903 = vadd.xlane.f32.xlu0 %v872
    %v904 = vpop.xlane.xlu0 %903
    %905 = vadd.xlane.f32.xlu0 %v874
    %v906 = vpop.xlane.xlu0 %905
    %907 = vadd.xlane.f32.xlu0 %v876
    %v908 = vpop.xlane.xlu0 %907
    %909 = vadd.xlane.f32.xlu0 %v878
    %v910 = vpop.xlane.xlu0 %909
    %911 = vadd.xlane.f32.xlu0 %v880
    %v912 = vpop.xlane.xlu0 %911
    %913 = vadd.xlane.f32.xlu0 %v882
    %v914 = vpop.xlane.xlu0 %913
    %915 = vadd.xlane.f32.xlu0 %v884
    %v916 = vpop.xlane.xlu0 %915
    %917 = vadd.xlane.f32.xlu0 %v886
    %v918 = vpop.xlane.xlu0 %917
    %919 = vadd.xlane.f32.xlu0 %v888
    %v920 = vpop.xlane.xlu0 %919
    %921 = vadd.xlane.f32.xlu0 %v890
    %v922 = vpop.xlane.xlu0 %921
    %923 = vadd.xlane.f32.xlu0 %v892
    %v924 = vpop.xlane.xlu0 %923
    %925 = vadd.xlane.f32.xlu0 %v894
    %v926 = vpop.xlane.xlu0 %925
    %927 = vadd.xlane.f32.xlu0 %v896
    %v928 = vpop.xlane.xlu0 %927
    %v929 = vrcp.pop %v898
    %v930 = vrcp.pop %v900
    %v931 = vrcp.pop %v902
    %v932 = vrcp.pop %v904
    %v933 = vrcp.pop %v906
    %v934 = vrcp.pop %v908
    %v935 = vrcp.pop %v910
    %v936 = vrcp.pop %v912
    %v937 = vrcp.pop %v914
    %v938 = vrcp.pop %v916
    %v939 = vrcp.pop %v918
    %v940 = vrcp.pop %v920
    %v941 = vrcp.pop %v922
    %v942 = vrcp.pop %v924
    %v943 = vrcp.pop %v926
    %v944 = vrcp.pop %v928
    %v945 = vmul.f32 %v866, %v929
    %v946 = vmul.f32 %v868, %v930
    %v947 = vmul.f32 %v870, %v931
    %v948 = vmul.f32 %v872, %v932
    %v949 = vmul.f32 %v874, %v933
    %v950 = vmul.f32 %v876, %v934
    %v951 = vmul.f32 %v878, %v935
    %v952 = vmul.f32 %v880, %v936
    %v953 = vmul.f32 %v882, %v937
    %v954 = vmul.f32 %v884, %v938
    %v955 = vmul.f32 %v886, %v939
    %v956 = vmul.f32 %v888, %v940
    %v957 = vmul.f32 %v890, %v941
    %v958 = vmul.f32 %v892, %v942
    %v959 = vmul.f32 %v894, %v943
    %v960 = vmul.f32 %v896, %v944
    %961 = vst [vmem:[#allocation10] sm:$0xff] %v945
    %962 = vst [vmem:[#allocation10 + $0x8] sm:$0xff] %v946
    %963 = vst [vmem:[#allocation10 + $0x10] sm:$0xff] %v947
    %964 = vst [vmem:[#allocation10 + $0x18] sm:$0xff] %v948
    %965 = vst [vmem:[#allocation10 + $0x20] sm:$0xff] %v949
    %966 = vst [vmem:[#allocation10 + $0x28] sm:$0xff] %v950
    %967 = vst [vmem:[#allocation10 + $0x30] sm:$0xff] %v951
    %968 = vst [vmem:[#allocation10 + $0x38] sm:$0xff] %v952
    %969 = vst [vmem:[#allocation10 + $0x40] sm:$0xff] %v953
    %970 = vst [vmem:[#allocation10 + $0x48] sm:$0xff] %v954
    %971 = vst [vmem:[#allocation10 + $0x50] sm:$0xff] %v955
    %972 = vst [vmem:[#allocation10 + $0x58] sm:$0xff] %v956
    %973 = vst [vmem:[#allocation10 + $0x60] sm:$0xff] %v957
    %974 = vst [vmem:[#allocation10 + $0x68] sm:$0xff] %v958
    %975 = vst [vmem:[#allocation10 + $0x70] sm:$0xff] %v959
    %976 = vst [vmem:[#allocation10 + $0x78] sm:$0xff] %v960
    // Predicated region
    $region41: #{tpu_custom_call.1} parent=1 // pred_check
      _
    $region42: #{tpu_custom_call.1} parent=1 // pred_check_branch
      %978 = sbr.rel (0) target = $region44
    $region43: #{tpu_custom_call.1} parent=1 // pred_region
      %s980 = ssub.s32 2048, 2048
      %981 = vsyncadd [#allocation7], %s980
      %s982 = sshll.u32 [#allocation10], 4
      %s983 = int_to_ptr.vmem [resolvable:$true] %s982
      %988 = dma.vmem_to_hbm [thread:$0]  %s983, 2048, %s7, [#allocation7], 128, 128, 8
    $region44: #{tpu_custom_call.1} parent=1 // pred_fallthru
      _
    // Predicated region
    $region45: #{tpu_custom_call.1} parent=1 // pred_check
      _
    $region46: #{tpu_custom_call.1} parent=1 // pred_check_branch
      %990 = sbr.rel (0) target = $region48
    $region47: #{tpu_custom_call.1} parent=1 // pred_region
      %991 = dma.done [#allocation7], 2048
    $region48: #{tpu_custom_call.1} parent=1 // pred_fallthru
      _
    %992 = vsyncpa [#allocation6], 1
    %993 = vsyncpa [#allocation9], 1
    %994 = vsyncpa [#allocation7], 1

</llo_original>
